<compile_context>
chip_gen: v7x
topology: tpu7x:2x2x1
jax: 0.10.0
libtpu: 0.0.40
codegen_flags: <defaults>
</compile_context>

<pallas_src>
import functools

import jax
import jax.numpy as jnp
from jax.experimental import pallas as pl
from jax.experimental.pallas import tpu as pltpu

_MIB = 1024 * 1024


def _round_up(a, b):
    return ((a + b - 1) // b) * b


def _vmem_capacity_bytes():
    try:
        return int(pltpu.get_tpu_info().vmem_capacity_bytes)
    except Exception:
        return 64 * _MIB  # conservative (v7x-sized) fallback


def ffn_kernel_chunked(x_ref, w1_ref, b1_ref, w2_ref, b2_ref, o_ref, acc_ref):
    # x_ref:  (tm, d_model)      w1_ref: (d_model, tf)   b1_ref: (1, tf)
    # w2_ref: (tf, d_model)      b2_ref: (1, d_model)
    # o_ref:  (tm, d_model)      acc_ref: (tm, d_model) f32 scratch
    j = pl.program_id(1)

    @pl.when(j == 0)
    def _init():
        acc_ref[...] = jnp.zeros_like(acc_ref)

    h = jnp.dot(x_ref[...], w1_ref[...], preferred_element_type=jnp.float32)
    h = jnp.maximum(h + b1_ref[...].astype(jnp.float32), 0.0)   # ReLU
    # (dropout == identity in eval mode)
    acc_ref[...] += jnp.dot(h.astype(w2_ref.dtype), w2_ref[...],
                            preferred_element_type=jnp.float32)

    @pl.when(j == pl.num_programs(1) - 1)
    def _finalize():
        o_ref[...] = (acc_ref[...] + b2_ref[...].astype(jnp.float32)
                      ).astype(o_ref.dtype)


def ffn_kernel_single(x_ref, w1_ref, b1_ref, w2_ref, b2_ref, o_ref):
    # Whole d_ff fits in one chunk: no accumulator scratch, direct store.
    h = jnp.dot(x_ref[...], w1_ref[...], preferred_element_type=jnp.float32)
    h = jnp.maximum(h + b1_ref[...].astype(jnp.float32), 0.0)   # ReLU
    y = jnp.dot(h.astype(w2_ref.dtype), w2_ref[...],
                preferred_element_type=jnp.float32)
    o_ref[...] = (y + b2_ref[...].astype(jnp.float32)).astype(o_ref.dtype)


@functools.partial(jax.jit, static_argnames=("tm", "tf", "compute_dtype"))
def feed_forward(x, w1, b1, w2, b2, *, tm=512, tf=512, compute_dtype=None):
    """x: [batch, seq, d_model] -> [batch, seq, d_model].

    tm: row tile target (>=256 recommended on all generations; auto-shrunk to
        fit VMEM).  tf: d_ff chunk width target (multiple of 128 preferred).
    compute_dtype: optional matmul operand dtype (e.g. jnp.bfloat16);
        accumulation stays f32, output keeps x.dtype.
    """
    batch, seq, d_model = x.shape
    d_ff = w1.shape[1]
    n = batch * seq
    out_dtype = x.dtype

    cdt = jnp.dtype(compute_dtype) if compute_dtype is not None else jnp.dtype(x.dtype)
    c_item = cdt.itemsize
    o_item = jnp.dtype(out_dtype).itemsize

    b1 = jnp.asarray(b1).reshape(1, -1)
    b2 = jnp.asarray(b2).reshape(1, -1)
    b_item = jnp.dtype(b1.dtype).itemsize

    # ---- Row tiling: round to the dtype sublane tile (8 f32 / 16 bf16 / 32 i8).
    sublane = max(8, 32 // c_item)
    tm_eff = _round_up(max(sublane, min(tm, _round_up(n, sublane))), sublane)
    n_pad = _round_up(n, tm_eff)
    grid_m = n_pad // tm_eff

    # ---- Hidden-dim tiling: prefer a multiple-of-128 divisor of d_ff so no
    #      host-side weight padding/copy is needed.
    if d_ff <= tf:
        tf_eff, d_ff_pad = d_ff, d_ff
    else:
        tf_eff = 0
        cand = (min(tf, d_ff) // 128) * 128
        while cand >= 128:
            if d_ff % cand == 0:
                tf_eff = cand
                break
            cand -= 128
        if tf_eff == 0:
            # Rare fallback: pad d_ff (exact: relu(0)=0 and zero W2 rows add 0).
            tf_eff = max(128, (tf // 128) * 128)
            d_ff_pad = _round_up(d_ff, tf_eff)
        else:
            d_ff_pad = d_ff
    grid_f = d_ff_pad // tf_eff

    # ---- Per-generation VMEM budget (computed from block sizes, with headroom).
    capacity = _vmem_capacity_bytes()
    headroom = max(12 * _MIB, capacity // 8)
    budget = capacity - headroom

    # ---- Megacore balance on 64-MiB-VMEM parts (v7x: 2 TCs/chip): avoid a
    #      single row tile hogging one core when it can be split.
    if capacity <= 64 * _MIB and grid_m == 1 and tm_eff >= 512:
        tm_eff = _round_up((n + 1) // 2, sublane)
        n_pad = _round_up(n, tm_eff)
        grid_m = n_pad // tm_eff

    def _vmem_needed(tm_e, w_bufs):
        bytes_ = 2 * tm_e * d_model * c_item          # x blocks (double-buffered)
        bytes_ += 2 * tm_e * d_model * o_item         # out blocks (double-buffered)
        bytes_ += w_bufs * d_model * tf_eff * c_item  # W1 chunk buffers
        bytes_ += w_bufs * tf_eff * d_model * c_item  # W2 chunk buffers
        bytes_ += 2 * (tf_eff + d_model) * b_item     # b1 / b2 blocks
        if grid_f > 1:
            bytes_ += tm_e * d_model * 4              # f32 accumulator scratch
        return bytes_

    while _vmem_needed(tm_eff, 2) > budget and tm_eff > sublane:
        tm_eff = max(sublane, _round_up(tm_eff // 2, sublane))
        n_pad = _round_up(n, tm_eff)
        grid_m = n_pad // tm_eff

    # Third weight buffer only when chunks are big enough to matter and the
    # part has the VMEM to spare (v6e-class, 128 MiB).
    weight_chunk_bytes = 2 * d_model * tf_eff * c_item
    use_triple_w = (grid_f > 1
                    and capacity >= 96 * _MIB
                    and weight_chunk_bytes >= 4 * _MIB
                    and _vmem_needed(tm_eff, 3) <= budget)
    w_bufs = 3 if use_triple_w else 2
    vmem_limit = min(budget, max(_vmem_needed(tm_eff, w_bufs) + 8 * _MIB,
                                 32 * _MIB))

    # ---- Host-side prep (no weight copies in the common case).
    x2d = x.reshape(n, d_model)
    if x2d.dtype != cdt:
        x2d = x2d.astype(cdt)
    if w1.dtype != cdt:
        w1 = w1.astype(cdt)
    if w2.dtype != cdt:
        w2 = w2.astype(cdt)
    if n_pad != n:
        x2d = jnp.pad(x2d, ((0, n_pad - n), (0, 0)))
    if d_ff_pad != d_ff:
        pad_f = d_ff_pad - d_ff
        w1 = jnp.pad(w1, ((0, 0), (0, pad_f)))
        b1 = jnp.pad(b1, ((0, 0), (0, pad_f)))
        w2 = jnp.pad(w2, ((0, pad_f), (0, 0)))

    # ---- Cost estimate reflecting real traffic (weights re-read per row tile).
    cost = pl.CostEstimate(
        flops=4 * n_pad * d_model * d_ff_pad,
        transcendentals=0,
        bytes_accessed=(n_pad * d_model * (c_item + o_item)
                        + grid_m * 2 * d_model * d_ff_pad * c_item
                        + grid_m * (d_ff_pad + d_model) * b_item),
    )

    if grid_f == 1:
        grid_spec = pltpu.PrefetchScalarGridSpec(
            num_scalar_prefetch=0,
            grid=(grid_m,),
            in_specs=[
                pl.BlockSpec((tm_eff, d_model), lambda i: (i, 0)),   # x rows
                pl.BlockSpec((d_model, tf_eff), lambda i: (0, 0)),   # W1 (full)
                pl.BlockSpec((1, tf_eff), lambda i: (0, 0)),         # b1
                pl.BlockSpec((tf_eff, d_model), lambda i: (0, 0)),   # W2 (full)
                pl.BlockSpec((1, d_model), lambda i: (0, 0)),        # b2
            ],
            out_specs=pl.BlockSpec((tm_eff, d_model), lambda i: (i, 0)),
            scratch_shapes=[],
        )
        kernel = ffn_kernel_single
        dim_sem = ("parallel",)
    else:
        if use_triple_w:
            w1_spec = pl.BlockSpec((d_model, tf_eff), lambda i, j: (0, j),
                                   pipeline_mode=pl.Buffered(3))
            w2_spec = pl.BlockSpec((tf_eff, d_model), lambda i, j: (j, 0),
                                   pipeline_mode=pl.Buffered(3))
        else:
            w1_spec = pl.BlockSpec((d_model, tf_eff), lambda i, j: (0, j))
            w2_spec = pl.BlockSpec((tf_eff, d_model), lambda i, j: (j, 0))
        grid_spec = pltpu.PrefetchScalarGridSpec(
            num_scalar_prefetch=0,
            grid=(grid_m, grid_f),
            in_specs=[
                pl.BlockSpec((tm_eff, d_model), lambda i, j: (i, 0)),  # x rows
                w1_spec,                                               # W1 chunk
                pl.BlockSpec((1, tf_eff), lambda i, j: (0, j)),        # b1 chunk
                w2_spec,                                               # W2 chunk
                pl.BlockSpec((1, d_model), lambda i, j: (0, 0)),       # b2
            ],
            out_specs=pl.BlockSpec((tm_eff, d_model), lambda i, j: (i, 0)),
            scratch_shapes=[pltpu.VMEM((tm_eff, d_model), jnp.float32)],
        )
        kernel = ffn_kernel_chunked
        dim_sem = ("parallel", "arbitrary")

    out = pl.pallas_call(
        kernel,
        out_shape=jax.ShapeDtypeStruct((n_pad, d_model), out_dtype),
        grid_spec=grid_spec,
        compiler_params=pltpu.CompilerParams(
            dimension_semantics=dim_sem,
            vmem_limit_bytes=int(vmem_limit),
        ),
        cost_estimate=cost,
    )(x2d, w1, b1, w2, b2)

    return out[:n].reshape(batch, seq, d_model)


def init_params(key, d_model, d_ff, dtype=jnp.float32):
    """Deterministic init matching nn.Linear shapes (stored pre-transposed)."""
    k1, k2, k3, k4 = jax.random.split(key, 4)
    bound1 = 1.0 / (d_model ** 0.5)
    bound2 = 1.0 / (d_ff ** 0.5)
    # PyTorch nn.Linear weight is (out, in); keep kernel-friendly (in, out).
    w1 = jax.random.uniform(k1, (d_model, d_ff), dtype, -bound1, bound1)
    b1 = jax.random.uniform(k2, (1, d_ff), dtype, -bound1, bound1)
    w2 = jax.random.uniform(k3, (d_ff, d_model), dtype, -bound2, bound2)
    b2 = jax.random.uniform(k4, (1, d_model), dtype, -bound2, bound2)
    return w1, b1, w2, b2


if __name__ == "__main__":
    # --- Small f32 test (single-chunk path) ---
    d_model, d_ff = 32, 64
    batch, seq = 2, 8
    key = jax.random.PRNGKey(0)
    kx, kp = jax.random.split(key)
    x = jax.random.normal(kx, (batch, seq, d_model), jnp.float32)
    w1, b1, w2, b2 = init_params(kp, d_model, d_ff)

    y = jax.block_until_ready(feed_forward(x, w1, b1, w2, b2))
    ref = jnp.maximum(x @ w1 + b1[0], 0.0) @ w2 + b2[0]
    assert y.shape == (batch, seq, d_model)
    assert jnp.allclose(y, ref, atol=1e-5, rtol=1e-5)

    # --- Non-divisible chunked shape: tail rows + d_ff chunking (no weight pad) ---
    d_model2, d_ff2 = 128, 384
    batch2, seq2 = 3, 23            # n = 69, not a multiple of the row tile
    kx2, kp2 = jax.random.split(kp)
    x2 = jax.random.normal(kx2, (batch2, seq2, d_model2), jnp.float32)
    w1b, b1b, w2b, b2b = init_params(kp2, d_model2, d_ff2)
    y2 = jax.block_until_ready(
        feed_forward(x2, w1b, b1b, w2b, b2b, tm=64, tf=128))
    ref2 = jnp.maximum(x2 @ w1b + b1b[0], 0.0) @ w2b + b2b[0]
    assert jnp.allclose(y2, ref2, atol=1e-4, rtol=1e-4)

    # --- bf16 operand / f32 accumulation path (matches same-rounding reference) ---
    y3 = jax.block_until_ready(
        feed_forward(x2, w1b, b1b, w2b, b2b, tm=64, tf=128,
                     compute_dtype=jnp.bfloat16))
    xb = x2.reshape(-1, d_model2).astype(jnp.bfloat16)
    w1bb = w1b.astype(jnp.bfloat16)
    w2bb = w2b.astype(jnp.bfloat16)
    hb = jnp.maximum(
        jnp.dot(xb, w1bb, preferred_element_type=jnp.float32) + b1b[0], 0.0)
    ref3 = (jnp.dot(hb.astype(jnp.bfloat16), w2bb,
                    preferred_element_type=jnp.float32) + b2b[0]
            ).reshape(x2.shape)
    assert y3.dtype == x2.dtype
    assert jnp.allclose(y3, ref3, atol=5e-3, rtol=5e-3)

    print("KERNEL_OK")
</pallas_src>

<mosaic_0001>
module attributes {stable_mosaic.version = 11 : i64} {
  func.func @ffn_kernel_single(%arg0: i32, %arg1: memref<16x32xf32, #tpu.memory_space<vmem>>, %arg2: memref<32x64xf32, #tpu.memory_space<vmem>>, %arg3: memref<1x64xf32, #tpu.memory_space<vmem>>, %arg4: memref<64x32xf32, #tpu.memory_space<vmem>>, %arg5: memref<1x32xf32, #tpu.memory_space<vmem>>, %arg6: memref<16x32xf32, #tpu.memory_space<vmem>>) attributes {dimension_semantics = [#tpu.dimension_semantics<parallel>], iteration_bounds = array<i64: 1>, scalar_prefetch = 0 : i64, scratch_operands = 0 : i64, tpu.core_type = #tpu.core_type<tc>, window_params = [{transform_indices = @transform_0, window_bounds = array<i64: 16, 32>}, {pipeline_mode = #tpu.pipeline_mode<synchronous>, transform_indices = @transform_1, window_bounds = array<i64: 32, 64>}, {pipeline_mode = #tpu.pipeline_mode<synchronous>, transform_indices = @transform_2, window_bounds = array<i64: 1, 64>}, {pipeline_mode = #tpu.pipeline_mode<synchronous>, transform_indices = @transform_3, window_bounds = array<i64: 64, 32>}, {pipeline_mode = #tpu.pipeline_mode<synchronous>, transform_indices = @transform_4, window_bounds = array<i64: 1, 32>}, {transform_indices = @transform_5, window_bounds = array<i64: 16, 32>}]} {
    %c0 = arith.constant 0 : index
    %c0_0 = arith.constant 0 : index
    %0 = vector.load %arg1[%c0, %c0_0] : memref<16x32xf32, #tpu.memory_space<vmem>>, vector<16x32xf32>
    %c0_1 = arith.constant 0 : index
    %c0_2 = arith.constant 0 : index
    %1 = vector.load %arg2[%c0_1, %c0_2] : memref<32x64xf32, #tpu.memory_space<vmem>>, vector<32x64xf32>
    %cst = arith.constant dense<0.000000e+00> : vector<16x64xf32>
    %2 = tpu.matmul %0, %1, %cst {dimension_numbers = #tpu.dot_dimension_numbers<[1], [0], [0], [1], [0, 0, 1, 1], [], []>} : vector<16x32xf32>, vector<32x64xf32>, vector<16x64xf32> -> vector<16x64xf32>
    %c0_3 = arith.constant 0 : index
    %c0_4 = arith.constant 0 : index
    %3 = vector.load %arg3[%c0_3, %c0_4] : memref<1x64xf32, #tpu.memory_space<vmem>>, vector<1x64xf32>
    %4 = vector.broadcast %3 : vector<1x64xf32> to vector<16x64xf32>
    %5 = arith.addf %2, %4 : vector<16x64xf32>
    %cst_5 = arith.constant 0.000000e+00 : f32
    %6 = vector.broadcast %cst_5 : f32 to vector<16x64xf32>
    %7 = arith.maximumf %5, %6 : vector<16x64xf32>
    %c0_6 = arith.constant 0 : index
    %c0_7 = arith.constant 0 : index
    %8 = vector.load %arg4[%c0_6, %c0_7] : memref<64x32xf32, #tpu.memory_space<vmem>>, vector<64x32xf32>
    %cst_8 = arith.constant dense<0.000000e+00> : vector<16x32xf32>
    %9 = tpu.matmul %7, %8, %cst_8 {dimension_numbers = #tpu.dot_dimension_numbers<[1], [0], [0], [1], [0, 0, 1, 1], [], []>} : vector<16x64xf32>, vector<64x32xf32>, vector<16x32xf32> -> vector<16x32xf32>
    %c0_9 = arith.constant 0 : index
    %c0_10 = arith.constant 0 : index
    %10 = vector.load %arg5[%c0_9, %c0_10] : memref<1x32xf32, #tpu.memory_space<vmem>>, vector<1x32xf32>
    %11 = vector.broadcast %10 : vector<1x32xf32> to vector<16x32xf32>
    %12 = arith.addf %9, %11 : vector<16x32xf32>
    %c0_11 = arith.constant 0 : index
    %c0_12 = arith.constant 0 : index
    %13 = vector.load %arg6[%c0_11, %c0_12] : memref<16x32xf32, #tpu.memory_space<vmem>>, vector<16x32xf32>
    tpu.vector_store %arg6[%c0_11, %c0_12], %12 {strides = array<i32>} : memref<16x32xf32, #tpu.memory_space<vmem>>, vector<16x32xf32>,
    return
  }
  func.func @transform_0(%arg0: i32) -> (i32, i32) {
    %c0_i32 = arith.constant 0 : i32
    %c0_i32_0 = arith.constant 0 : i32
    return %arg0, %c0_i32 : i32, i32
  }
  func.func @transform_1(%arg0: i32) -> (i32, i32) {
    %c0_i32 = arith.constant 0 : i32
    %c0_i32_0 = arith.constant 0 : i32
    %c0_i32_1 = arith.constant 0 : i32
    return %c0_i32, %c0_i32_0 : i32, i32
  }
  func.func @transform_2(%arg0: i32) -> (i32, i32) {
    %c0_i32 = arith.constant 0 : i32
    %c0_i32_0 = arith.constant 0 : i32
    %c0_i32_1 = arith.constant 0 : i32
    return %c0_i32, %c0_i32_0 : i32, i32
  }
  func.func @transform_3(%arg0: i32) -> (i32, i32) {
    %c0_i32 = arith.constant 0 : i32
    %c0_i32_0 = arith.constant 0 : i32
    %c0_i32_1 = arith.constant 0 : i32
    return %c0_i32, %c0_i32_0 : i32, i32
  }
  func.func @transform_4(%arg0: i32) -> (i32, i32) {
    %c0_i32 = arith.constant 0 : i32
    %c0_i32_0 = arith.constant 0 : i32
    %c0_i32_1 = arith.constant 0 : i32
    return %c0_i32, %c0_i32_0 : i32, i32
  }
  func.func @transform_5(%arg0: i32) -> (i32, i32) {
    %c0_i32 = arith.constant 0 : i32
    %c0_i32_0 = arith.constant 0 : i32
    return %arg0, %c0_i32 : i32, i32
  }
}

</mosaic_0001>

<llo_original>
// kernel: feed_forward.1
$region0: #{feed_forward.1}
  #allocation0 [shape = 'u32[]', space=smem, size = 0x4, offset = 0x4, fixed_abs, tag = 'smem constant byte address 0x4 - core index']
  #allocation1 [shape = 'u32[144,128]{1,0:T(1,128)}', space=vmem, size = 0x12000, scoped, tag = 'internal scratch']
  %s0 = inlined_call_operand.vmem [shape: f32[16,32], index: 0, kind: input, shape index: {}]
  %s1 = inlined_call_operand.vmem [shape: f32[32,64], index: 1, kind: input, shape index: {}]
  %s2 = inlined_call_operand.vmem [shape: f32[1,64], index: 2, kind: input, shape index: {}]
  %s3 = inlined_call_operand.vmem [shape: f32[64,32], index: 3, kind: input, shape index: {}]
  %s4 = inlined_call_operand.vmem [shape: f32[1,32], index: 4, kind: input, shape index: {}]
  %s5 = inlined_call_operand.hbm [shape: f32[16,32], index: 5, kind: output, shape index: {}]
  %s6 = sld [smem:[#allocation0]]
  $region30: #{feed_forward.1} parent=0
    _
  %s8 = ssub.s32 1, %s6
  %s9 = scalar_select 0, %s8, %s6
  $region1: #{feed_forward.1} parent=0
    #allocation2 [shape = 'u8[8192]{0}', space=vmem, size = 0x2000, scoped, tag = 'output window, operand 0, single buffered']
    #allocation3 [shape = 's32[1]{0}', space=sflag, size = 0x4, scoped, tag = 'scoped memory for feed_forward.1']
    %10 = vsyncpa [#allocation3], 0
    // Predicated region
    $region2: #{feed_forward.1} parent=1 // pred_check
      _
    $region3: #{feed_forward.1} parent=1 // pred_check_branch
      %12 = sbr.rel (0) target = $region5
    $region4: #{feed_forward.1} parent=1 // pred_region
      _
    $region5: #{feed_forward.1} parent=1 // pred_fallthru
      _
    // Predicated region
    $region6: #{feed_forward.1} parent=1 // pred_check
      _
    $region7: #{feed_forward.1} parent=1 // pred_check_branch
      %14 = sbr.rel (0) target = $region9
    $region8: #{feed_forward.1} parent=1 // pred_region
      _
    $region9: #{feed_forward.1} parent=1 // pred_fallthru
      _
    // Predicated region
    $region10: #{feed_forward.1} parent=1 // pred_check
      _
    $region11: #{feed_forward.1} parent=1 // pred_check_branch
      %16 = sbr.rel (0) target = $region13
    $region12: #{feed_forward.1} parent=1 // pred_region
      _
    $region13: #{feed_forward.1} parent=1 // pred_fallthru
      _
    // Predicated region
    $region14: #{feed_forward.1} parent=1 // pred_check
      _
    $region15: #{feed_forward.1} parent=1 // pred_check_branch
      %18 = sbr.rel (0) target = $region17
    $region16: #{feed_forward.1} parent=1 // pred_region
      _
    $region17: #{feed_forward.1} parent=1 // pred_fallthru
      _
    // Predicated region
    $region18: #{feed_forward.1} parent=1 // pred_check
      _
    $region19: #{feed_forward.1} parent=1 // pred_check_branch
      %20 = sbr.rel (0) target = $region21
    $region20: #{feed_forward.1} parent=1 // pred_region
      _
    $region21: #{feed_forward.1} parent=1 // pred_fallthru
      _
    %v21 = vld [vmem:[%s0] sm:$0xff]
    %v22 = vld [vmem:[%s0 + $0x8] sm:$0xff]
    %v23 = vld [vmem:[%s1] sm:$0xff]
    %v24 = vld [vmem:[%s1 + $0x8] sm:$0xff]
    %v25 = vld [vmem:[%s1 + $0x10] sm:$0xff]
    %v26 = vld [vmem:[%s1 + $0x18] sm:$0xff]
    %v27 = vld [vmem:[%s2] sm:$0x1]
    %v29 = vlaneseq
    %v30 = vshrl.u32 %v29, 7
    %v31 = vsub.s32 0, %v30
    %v32 = vrot.slane %v27, %v31
    %vm34 = vcmask 261120
    %v36 = vsel %vm34, %v21, 0
    %v39 = vsel %vm34, %v22, 0
    %41 = vmatprep.subr.mxu0 0.0
    %42 = vmatpush1.msra.mxu0 %v23
    %43 = vmatprep.subr.mxu0 0.0
    %44 = vmatpush1.msra.mxu0 %v24
    %45 = vmatprep.subr.mxu0 0.0
    %46 = vmatpush1.msra.mxu0 %v25
    %47 = vmatprep.subr.mxu0 0.0
    %48 = vmatpush1.msra.mxu0 %v26
    %49 = vmatprep.subr.mxu0 0.0
    %50 = vmatpush1.msra.mxu0 0.0
    %51 = vmatprep.subr.mxu0 0.0
    %52 = vmatpush1.msra.mxu0 0.0
    %53 = vmatprep.subr.mxu0 0.0
    %54 = vmatpush1.msra.mxu0 0.0
    %55 = vmatprep.subr.mxu0 0.0
    %56 = vmatpush1.msra.mxu0 0.0
    %57 = vmatprep.subr.mxu0 0.0
    %58 = vmatpush1.msra.mxu0 0.0
    %59 = vmatprep.subr.mxu0 0.0
    %60 = vmatpush1.msra.mxu0 0.0
    %61 = vmatprep.subr.mxu0 0.0
    %62 = vmatpush1.msra.mxu0 0.0
    %63 = vmatprep.subr.mxu0 0.0
    %64 = vmatpush1.msra.mxu0 0.0
    %65 = vmatprep.subr.mxu0 0.0
    %66 = vmatpush1.msra.mxu0 0.0
    %67 = vmatprep.subr.mxu0 0.0
    %68 = vmatpush1.msra.mxu0 0.0
    %69 = vmatprep.subr.mxu0 0.0
    %70 = vmatpush1.msra.mxu0 0.0
    %71 = vmatprep.subr.mxu0 0.0
    %72 = vmatpush1.msra.mxu0 0.0
    %73 = vmatprep.subr.mxu0 0.0
    %74 = vmatpush1.msra.mxu0 0.0
    %75 = vmatprep.subr.mxu0 0.0
    %76 = vmatpush1.msra.mxu0 0.0
    %77 = vmatprep.subr.mxu0 0.0
    %78 = vmatpush1.msra.mxu0 0.0
    %79 = vmatprep.subr.mxu0 0.0
    %80 = vmatpush1.msra.mxu0 0.0
    %81 = vmatprep.subr.mxu0 0.0
    %82 = vmatpush1.msra.mxu0 0.0
    %83 = vmatprep.subr.mxu0 0.0
    %84 = vmatpush1.msra.mxu0 0.0
    %85 = vmatprep.subr.mxu0 0.0
    %86 = vmatpush1.msra.mxu0 0.0
    %87 = vmatprep.subr.mxu0 0.0
    %88 = vmatpush1.msra.mxu0 0.0
    %89 = vmatprep.subr.mxu0 0.0
    %90 = vmatpush1.msra.mxu0 0.0
    %91 = vmatprep.subr.mxu0 0.0
    %92 = vmatpush1.msra.mxu0 0.0
    %93 = vmatprep.subr.mxu0 0.0
    %94 = vmatpush1.msra.mxu0 0.0
    %95 = vmatprep.subr.mxu0 0.0
    %96 = vmatpush1.msra.mxu0 0.0
    %97 = vmatprep.subr.mxu0 0.0
    %98 = vmatpush1.msra.mxu0 0.0
    %99 = vmatprep.subr.mxu0 0.0
    %100 = vmatpush1.msra.mxu0 0.0
    %101 = vmatprep.subr.mxu0 0.0
    %102 = vmatpush1.msra.mxu0 0.0
    %103 = vmatprep.subr.mxu0 0.0
    %104 = vmatpush1.msra.mxu0 0.0
    %105 = vmatprep.mubr.f32.mxu0 0.0
    %106 = vmatmul.mubr.f32.gmra.mrb[0].mxu0 %v36
    %v107 = vpop.f32.mrb[0].mxu0
    %v108 = vadd.f32 %v32, %v107
    %v109 = vpop.f32.mrb[0].mxu0
    %110 = vmatprep.mubr.f32.mxu0 0.0
    %111 = vmatmul.mubr.f32.gmra.mrb[0].mxu0 %v39
    %v112 = vpop.f32.mrb[0].mxu0
    %v113 = vadd.f32 %v32, %v112
    %v114 = vpop.f32.mrb[0].mxu0
    %115 = vdwg.mxu0
    %v116 = vmax.f32 %v108, 0.0
    %v117 = vmax.f32 %v113, 0.0
    %v118 = vld [vmem:[%s3] sm:$0xff]
    %v119 = vld [vmem:[%s3 + $0x8] sm:$0xff]
    %v120 = vld [vmem:[%s3 + $0x10] sm:$0xff]
    %v121 = vld [vmem:[%s3 + $0x18] sm:$0xff]
    %v122 = vld [vmem:[%s3 + $0x20] sm:$0xff]
    %v123 = vld [vmem:[%s3 + $0x28] sm:$0xff]
    %v124 = vld [vmem:[%s3 + $0x30] sm:$0xff]
    %v125 = vld [vmem:[%s3 + $0x38] sm:$0xff]
    %v126 = vld [vmem:[%s4] sm:$0x1]
    %v128 = vlaneseq
    %v129 = vshrl.u32 %v128, 7
    %v130 = vsub.s32 0, %v129
    %v131 = vrot.slane %v126, %v130
    %vm133 = vcmask 523264
    %v135 = vsel %vm133, %v116, 0
    %v138 = vsel %vm133, %v117, 0
    %140 = vmatprep.subr.mxu0 0.0
    %141 = vmatpush1.msra.mxu0 %v118
    %142 = vmatprep.subr.mxu0 0.0
    %143 = vmatpush1.msra.mxu0 %v119
    %144 = vmatprep.subr.mxu0 0.0
    %145 = vmatpush1.msra.mxu0 %v120
    %146 = vmatprep.subr.mxu0 0.0
    %147 = vmatpush1.msra.mxu0 %v121
    %148 = vmatprep.subr.mxu0 0.0
    %149 = vmatpush1.msra.mxu0 %v122
    %150 = vmatprep.subr.mxu0 0.0
    %151 = vmatpush1.msra.mxu0 %v123
    %152 = vmatprep.subr.mxu0 0.0
    %153 = vmatpush1.msra.mxu0 %v124
    %154 = vmatprep.subr.mxu0 0.0
    %155 = vmatpush1.msra.mxu0 %v125
    %156 = vmatprep.subr.mxu0 0.0
    %157 = vmatpush1.msra.mxu0 0.0
    %158 = vmatprep.subr.mxu0 0.0
    %159 = vmatpush1.msra.mxu0 0.0
    %160 = vmatprep.subr.mxu0 0.0
    %161 = vmatpush1.msra.mxu0 0.0
    %162 = vmatprep.subr.mxu0 0.0
    %163 = vmatpush1.msra.mxu0 0.0
    %164 = vmatprep.subr.mxu0 0.0
    %165 = vmatpush1.msra.mxu0 0.0
    %166 = vmatprep.subr.mxu0 0.0
    %167 = vmatpush1.msra.mxu0 0.0
    %168 = vmatprep.subr.mxu0 0.0
    %169 = vmatpush1.msra.mxu0 0.0
    %170 = vmatprep.subr.mxu0 0.0
    %171 = vmatpush1.msra.mxu0 0.0
    %172 = vmatprep.subr.mxu0 0.0
    %173 = vmatpush1.msra.mxu0 0.0
    %174 = vmatprep.subr.mxu0 0.0
    %175 = vmatpush1.msra.mxu0 0.0
    %176 = vmatprep.subr.mxu0 0.0
    %177 = vmatpush1.msra.mxu0 0.0
    %178 = vmatprep.subr.mxu0 0.0
    %179 = vmatpush1.msra.mxu0 0.0
    %180 = vmatprep.subr.mxu0 0.0
    %181 = vmatpush1.msra.mxu0 0.0
    %182 = vmatprep.subr.mxu0 0.0
    %183 = vmatpush1.msra.mxu0 0.0
    %184 = vmatprep.subr.mxu0 0.0
    %185 = vmatpush1.msra.mxu0 0.0
    %186 = vmatprep.subr.mxu0 0.0
    %187 = vmatpush1.msra.mxu0 0.0
    %188 = vmatprep.subr.mxu0 0.0
    %189 = vmatpush1.msra.mxu0 0.0
    %190 = vmatprep.subr.mxu0 0.0
    %191 = vmatpush1.msra.mxu0 0.0
    %192 = vmatprep.subr.mxu0 0.0
    %193 = vmatpush1.msra.mxu0 0.0
    %194 = vmatprep.subr.mxu0 0.0
    %195 = vmatpush1.msra.mxu0 0.0
    %196 = vmatprep.subr.mxu0 0.0
    %197 = vmatpush1.msra.mxu0 0.0
    %198 = vmatprep.subr.mxu0 0.0
    %199 = vmatpush1.msra.mxu0 0.0
    %200 = vmatprep.subr.mxu0 0.0
    %201 = vmatpush1.msra.mxu0 0.0
    %202 = vmatprep.subr.mxu0 0.0
    %203 = vmatpush1.msra.mxu0 0.0
    %204 = vmatprep.mubr.f32.mxu0 0.0
    %205 = vmatmul.mubr.f32.gmra.mrb[0].mxu0 %v135
    %v206 = vpop.f32.mrb[0].mxu0
    %v207 = vadd.f32 %v131, %v206
    %v208 = vpop.f32.mrb[0].mxu0
    %209 = vmatprep.mubr.f32.mxu0 0.0
    %210 = vmatmul.mubr.f32.gmra.mrb[0].mxu0 %v138
    %v211 = vpop.f32.mrb[0].mxu0
    %v212 = vadd.f32 %v131, %v211
    %v213 = vpop.f32.mrb[0].mxu0
    %214 = vdwg.mxu0
    %215 = vst.msk [vmem:[#allocation2] sm:$0xff] %vm34, %v207
    %216 = vst.msk [vmem:[#allocation2 + $0x8] sm:$0xff] %vm34, %v212
    // Predicated region
    $region22: #{feed_forward.1} parent=1 // pred_check
      _
    $region23: #{feed_forward.1} parent=1 // pred_check_branch
      %218 = sbr.rel (0) target = $region25
    $region24: #{feed_forward.1} parent=1 // pred_region
      %s220 = ssub.s32 256, 256
      %221 = vsyncadd [#allocation3], %s220
      %s222 = sshll.u32 [#allocation2], 4
      %s223 = int_to_ptr.vmem [resolvable:$true] %s222
      %228 = dma.vmem_to_hbm [thread:$0]  %s223, 256, %s5, [#allocation3], 128, 128, 8
    $region25: #{feed_forward.1} parent=1 // pred_fallthru
      _
    // Predicated region
    $region26: #{feed_forward.1} parent=1 // pred_check
      _
    $region27: #{feed_forward.1} parent=1 // pred_check_branch
      %230 = sbr.rel (0) target = $region29
    $region28: #{feed_forward.1} parent=1 // pred_region
      %231 = dma.done [#allocation3], 256
    $region29: #{feed_forward.1} parent=1 // pred_fallthru
      _
    %232 = vsyncpa [#allocation3], 1

</llo_original>
